<compile_context>
chip_gen: v7x
topology: tpu7x:2x2x1
jax: 0.10.0
libtpu: 0.0.40
codegen_flags: <defaults>
</compile_context>

<pallas_src>
import functools

import jax
import jax.numpy as jnp
from jax.experimental import pallas as pl
from jax.experimental.pallas import tpu as pltpu


def mlp_kernel(x_ref, w1a_ref, w1b_ref, b1_ref, w2_ref, b2_ref, o_ref):
    # x_ref: (2, Bt)  -- features on sublanes, batch on lanes (lane-dense).
    x0 = x_ref[0:1, :]                          # (1, Bt)
    x1 = x_ref[1:2, :]                          # (1, Bt)

    # hidden = relu(W1 @ x + b1) as two VALU FMAs (no K=2 MXU matmul).
    # (64,1)*(1,Bt) broadcasts -> (64, Bt)
    h = w1a_ref[...] * x0 + w1b_ref[...] * x1 + b1_ref[...]
    h = jnp.maximum(h, 0.0)                     # ReLU, (64, Bt)

    # out = sigmoid(w2 . h + b2) as a sublane reduction (no N=1 MXU matmul).
    y = jnp.sum(h * w2_ref[...], axis=0, keepdims=True) + b2_ref[...]  # (1, Bt)
    o_ref[...] = jax.nn.sigmoid(y).astype(o_ref.dtype)                  # EUP, lane-dense


@functools.partial(jax.jit, static_argnames=("block_b",))
def complex_neural_network(x, w1, b1, w2, b2, *, block_b=256):
    """Forward pass matching the PyTorch module.

    x:  (B, 2)   float32
    w1: (64, 2)  hidden_layer.weight (PyTorch (out, in) layout)
    b1: (64,)    hidden_layer.bias
    w2: (1, 64)  output_layer.weight
    b2: (1,)     output_layer.bias
    returns (B, 1) float32
    """
    B = x.shape[0]
    H = w1.shape[0]                             # 64

    grid_b = pl.cdiv(B, block_b)
    Bp = grid_b * block_b

    # Layout plumbing (outside the kernel): batch onto the 128-lane axis.
    xt = jnp.transpose(x)                       # (2, B) feature-major
    if Bp != B:
        xt = jnp.pad(xt, ((0, 0), (0, Bp - B)))  # zero-pad batch to tile multiple

    w1a = w1[:, 0:1]                            # (64, 1)  column 0
    w1b = w1[:, 1:2]                            # (64, 1)  column 1
    b1c = b1.reshape(H, 1)                      # (64, 1)
    w2c = w2.reshape(H, 1)                      # (64, 1)  column vector
    b2c = b2.reshape(1, 1)                      # (1, 1)

    out_t = pl.pallas_call(
        mlp_kernel,
        out_shape=jax.ShapeDtypeStruct((1, Bp), jnp.float32),
        grid=(grid_b,),
        in_specs=[
            pl.BlockSpec((2, block_b), lambda i: (0, i)),   # x tile, lane-dense in batch
            pl.BlockSpec((H, 1), lambda i: (0, 0)),          # w1 col0 (VMEM-resident)
            pl.BlockSpec((H, 1), lambda i: (0, 0)),          # w1 col1
            pl.BlockSpec((H, 1), lambda i: (0, 0)),          # b1
            pl.BlockSpec((H, 1), lambda i: (0, 0)),          # w2
            pl.BlockSpec((1, 1), lambda i: (0, 0)),          # b2
        ],
        out_specs=pl.BlockSpec((1, block_b), lambda i: (0, i)),
        compiler_params=pltpu.CompilerParams(
            dimension_semantics=("parallel",)),              # shard batch tiles across TCs
    )(xt, w1a, w1b, b1c, w2c, b2c)

    # Back to the PyTorch output layout (B, 1), dropping padded columns.
    return out_t[:, :B].T


if __name__ == "__main__":
    # Deterministic parameters matching nn.init.constant_(…, 0.1), in the
    # original PyTorch layouts.
    w1 = jnp.full((64, 2), 0.1, dtype=jnp.float32)   # hidden_layer.weight
    b1 = jnp.full((64,), 0.1, dtype=jnp.float32)     # hidden_layer.bias
    w2 = jnp.full((1, 64), 0.1, dtype=jnp.float32)   # output_layer.weight
    b2 = jnp.full((1,), 0.1, dtype=jnp.float32)      # output_layer.bias

    # Deterministic input: batch sized to give >1 lane-dense tiles (tile=256).
    key = jax.random.PRNGKey(0)
    B = 512
    x = jax.random.normal(key, (B, 2), dtype=jnp.float32)

    out = complex_neural_network(x, w1, b1, w2, b2)
    out = jax.block_until_ready(out)

    # Cross-check against plain-JAX reference of the same math (PyTorch layout).
    ref = jax.nn.sigmoid(jnp.maximum(x @ w1.T + b1, 0.0) @ w2.T + b2)
    assert out.shape == (B, 1)
    assert jnp.allclose(out, ref, atol=1e-5, rtol=1e-5)

    print("KERNEL_OK")
</pallas_src>

<mosaic_0001>
module attributes {stable_mosaic.version = 11 : i64} {
  func.func @mlp_kernel(%arg0: i32, %arg1: memref<2x256xf32, #tpu.memory_space<vmem>>, %arg2: memref<64x1xf32, #tpu.memory_space<vmem>>, %arg3: memref<64x1xf32, #tpu.memory_space<vmem>>, %arg4: memref<64x1xf32, #tpu.memory_space<vmem>>, %arg5: memref<64x1xf32, #tpu.memory_space<vmem>>, %arg6: memref<1x1xf32, #tpu.memory_space<vmem>>, %arg7: memref<1x256xf32, #tpu.memory_space<vmem>>) attributes {dimension_semantics = [#tpu.dimension_semantics<parallel>], iteration_bounds = array<i64: 2>, scalar_prefetch = 0 : i64, scratch_operands = 0 : i64, tpu.core_type = #tpu.core_type<tc>, window_params = [{transform_indices = @transform_0, window_bounds = array<i64: 2, 256>}, {pipeline_mode = #tpu.pipeline_mode<synchronous>, transform_indices = @transform_1, window_bounds = array<i64: 64, 1>}, {pipeline_mode = #tpu.pipeline_mode<synchronous>, transform_indices = @transform_2, window_bounds = array<i64: 64, 1>}, {pipeline_mode = #tpu.pipeline_mode<synchronous>, transform_indices = @transform_3, window_bounds = array<i64: 64, 1>}, {pipeline_mode = #tpu.pipeline_mode<synchronous>, transform_indices = @transform_4, window_bounds = array<i64: 64, 1>}, {pipeline_mode = #tpu.pipeline_mode<synchronous>, transform_indices = @transform_5, window_bounds = array<i64: 1, 1>}, {transform_indices = @transform_6, window_bounds = array<i64: 1, 256>}]} {
    %c0 = arith.constant 0 : index
    %c0_0 = arith.constant 0 : index
    %0 = vector.load %arg1[%c0, %c0_0] : memref<2x256xf32, #tpu.memory_space<vmem>>, vector<1x256xf32>
    %c1 = arith.constant 1 : index
    %c0_1 = arith.constant 0 : index
    %1 = vector.load %arg1[%c1, %c0_1] : memref<2x256xf32, #tpu.memory_space<vmem>>, vector<1x256xf32>
    %c0_2 = arith.constant 0 : index
    %c0_3 = arith.constant 0 : index
    %2 = vector.load %arg2[%c0_2, %c0_3] : memref<64x1xf32, #tpu.memory_space<vmem>>, vector<64x1xf32>
    %3 = vector.broadcast %2 : vector<64x1xf32> to vector<64x256xf32>
    %4 = vector.broadcast %0 : vector<1x256xf32> to vector<64x256xf32>
    %5 = arith.mulf %3, %4 : vector<64x256xf32>
    %c0_4 = arith.constant 0 : index
    %c0_5 = arith.constant 0 : index
    %6 = vector.load %arg3[%c0_4, %c0_5] : memref<64x1xf32, #tpu.memory_space<vmem>>, vector<64x1xf32>
    %7 = vector.broadcast %6 : vector<64x1xf32> to vector<64x256xf32>
    %8 = vector.broadcast %1 : vector<1x256xf32> to vector<64x256xf32>
    %9 = arith.mulf %7, %8 : vector<64x256xf32>
    %10 = arith.addf %5, %9 : vector<64x256xf32>
    %c0_6 = arith.constant 0 : index
    %c0_7 = arith.constant 0 : index
    %11 = vector.load %arg4[%c0_6, %c0_7] : memref<64x1xf32, #tpu.memory_space<vmem>>, vector<64x1xf32>
    %12 = vector.broadcast %11 : vector<64x1xf32> to vector<64x256xf32>
    %13 = arith.addf %10, %12 : vector<64x256xf32>
    %cst = arith.constant 0.000000e+00 : f32
    %14 = vector.broadcast %cst : f32 to vector<64x256xf32>
    %15 = arith.maximumf %13, %14 : vector<64x256xf32>
    %c0_8 = arith.constant 0 : index
    %c0_9 = arith.constant 0 : index
    %16 = vector.load %arg5[%c0_8, %c0_9] : memref<64x1xf32, #tpu.memory_space<vmem>>, vector<64x1xf32>
    %17 = vector.broadcast %16 : vector<64x1xf32> to vector<64x256xf32>
    %18 = arith.mulf %15, %17 : vector<64x256xf32>
    %cst_10 = arith.constant dense<0.000000e+00> : vector<256xf32>
    %19 = vector.multi_reduction <add>, %18, %cst_10 [0] : vector<64x256xf32> to vector<256xf32>
    %20 = vector.shape_cast %19 : vector<256xf32> to vector<1x256xf32>
    %c0_11 = arith.constant 0 : index
    %c0_12 = arith.constant 0 : index
    %21 = vector.load %arg6[%c0_11, %c0_12] : memref<1x1xf32, #tpu.memory_space<vmem>>, vector<1x1xf32>
    %22 = vector.broadcast %21 : vector<1x1xf32> to vector<1x256xf32>
    %23 = arith.addf %20, %22 : vector<1x256xf32>
    %24 = arith.negf %23 : vector<1x256xf32>
    %25 = math.exp %24 : vector<1x256xf32>
    %cst_13 = arith.constant 1.000000e+00 : f32
    %26 = vector.broadcast %cst_13 : f32 to vector<1x256xf32>
    %27 = arith.addf %26, %25 : vector<1x256xf32>
    %28 = arith.divf %26, %27 : vector<1x256xf32>
    %c0_14 = arith.constant 0 : index
    %c0_15 = arith.constant 0 : index
    %29 = vector.load %arg7[%c0_14, %c0_15] : memref<1x256xf32, #tpu.memory_space<vmem>>, vector<1x256xf32>
    tpu.vector_store %arg7[%c0_14, %c0_15], %28 {strides = array<i32>} : memref<1x256xf32, #tpu.memory_space<vmem>>, vector<1x256xf32>,
    return
  }
  func.func @transform_0(%arg0: i32) -> (i32, i32) {
    %c0_i32 = arith.constant 0 : i32
    %c0_i32_0 = arith.constant 0 : i32
    return %c0_i32, %arg0 : i32, i32
  }
  func.func @transform_1(%arg0: i32) -> (i32, i32) {
    %c0_i32 = arith.constant 0 : i32
    %c0_i32_0 = arith.constant 0 : i32
    %c0_i32_1 = arith.constant 0 : i32
    return %c0_i32, %c0_i32_0 : i32, i32
  }
  func.func @transform_2(%arg0: i32) -> (i32, i32) {
    %c0_i32 = arith.constant 0 : i32
    %c0_i32_0 = arith.constant 0 : i32
    %c0_i32_1 = arith.constant 0 : i32
    return %c0_i32, %c0_i32_0 : i32, i32
  }
  func.func @transform_3(%arg0: i32) -> (i32, i32) {
    %c0_i32 = arith.constant 0 : i32
    %c0_i32_0 = arith.constant 0 : i32
    %c0_i32_1 = arith.constant 0 : i32
    return %c0_i32, %c0_i32_0 : i32, i32
  }
  func.func @transform_4(%arg0: i32) -> (i32, i32) {
    %c0_i32 = arith.constant 0 : i32
    %c0_i32_0 = arith.constant 0 : i32
    %c0_i32_1 = arith.constant 0 : i32
    return %c0_i32, %c0_i32_0 : i32, i32
  }
  func.func @transform_5(%arg0: i32) -> (i32, i32) {
    %c0_i32 = arith.constant 0 : i32
    %c0_i32_0 = arith.constant 0 : i32
    %c0_i32_1 = arith.constant 0 : i32
    return %c0_i32, %c0_i32_0 : i32, i32
  }
  func.func @transform_6(%arg0: i32) -> (i32, i32) {
    %c0_i32 = arith.constant 0 : i32
    %c0_i32_0 = arith.constant 0 : i32
    return %c0_i32, %arg0 : i32, i32
  }
}

</mosaic_0001>

<llo_original>
// kernel: complex_neural_network.1
$region0: #{complex_neural_network.1}
  #allocation0 [shape = 'u32[]', space=smem, size = 0x4, offset = 0x4, fixed_abs, tag = 'smem constant byte address 0x4 - core index']
  #allocation1 [shape = 'u32[144,128]{1,0:T(1,128)}', space=vmem, size = 0x12000, scoped, tag = 'internal scratch']
  #allocation2 [shape = 'f32[1,1]{1,0:T(1,128)S(1)}', space=vmem, size = 0x200, scoped, tag = 'scoped memory for complex_neural_network.1']
  %s0 = inlined_call_operand.vmem [shape: f32[2,512], index: 0, kind: input, shape index: {}]
  %s1 = inlined_call_operand.vmem [shape: f32[64,1], index: 1, kind: input, shape index: {}]
  %s2 = inlined_call_operand.vmem [shape: f32[64,1], index: 2, kind: input, shape index: {}]
  %s3 = inlined_call_operand.vmem [shape: f32[64,1], index: 3, kind: input, shape index: {}]
  %s4 = inlined_call_operand.vmem [shape: f32[64,1], index: 4, kind: input, shape index: {}]
  %s5 = inlined_call_operand.<no memory space> [shape: f32[1,1], index: 5, kind: input, shape index: {}]
  %s6 = inlined_call_operand.hbm [shape: f32[1,512], index: 6, kind: output, shape index: {}]
  %s7 = sld [smem:[#allocation0]]
  $region57: #{complex_neural_network.1} parent=0
    _
  %s9 = ssub.s32 1, %s7
  %s10 = scalar_select 0, %s9, %s7
  %v11 = vstv %s5
  %12 = vst [vmem:[#allocation2] sm:$0x1] %v11
  $region1: #{complex_neural_network.1} parent=0
    #allocation3 [shape = 'u8[2048]{0}', space=vmem, size = 0x800, scoped, tag = 'output window, operand 0']
    #allocation4 [shape = 's32[2]{0}', space=sflag, size = 0x8, scoped, tag = 'scoped memory for complex_neural_network.1']
    %13 = vsyncpa [#allocation4], 0
    %s14 = scalar_lea.sflag [#allocation4], 1
    %15 = vsyncpa %s14, 0
    loop: start=0, step=1, limit=4
    $region2: #{complex_neural_network.1} parent=1 // loop_pre_header
      _
    $region3: #{complex_neural_network.1} parent=1 // loop_header
      %s17 = sphi 0, %s21
      %p18 = scmp.ge.s32.totalorder %s17, 4
      %s27 = sphi 0, %s29
      %s30 = sphi 0, %s27
      %s31 = sphi 0, %s30
      %s47 = sphi 0, %s31
      %s51 = sphi 0, %s51
      %s53 = sphi 0, %s51
      %s54 = sphi 0, %s53
      %s68 = sphi 0, %s54
      %s72 = sphi 0, %s72
      %s74 = sphi 0, %s72
      %s75 = sphi 0, %s74
      %s89 = sphi 0, %s75
      %s93 = sphi 0, %s93
      %s95 = sphi 0, %s93
      %s96 = sphi 0, %s95
      %s110 = sphi 0, %s96
      %s114 = sphi 0, %s114
      %s116 = sphi 0, %s114
      %s117 = sphi 0, %s116
      %s131 = sphi 0, %s117
      %s135 = sphi 0, %s135
      %s137 = sphi 0, %s135
      %s138 = sphi 0, %s137
      %s152 = sphi 0, %s138
      %s158 = sphi 0, %s160
      %s161 = sphi 0, %s158
      %s162 = sphi 0, %s161
      %s178 = sphi 0, %s162
    $region4: #{complex_neural_network.1} parent=1 // loop_header_branch
      %20 = sbr.rel (%p18) target = $region8
    $region5: #{complex_neural_network.1} parent=1 // loop_body
      %s22 = ssub.s32 %s17, 1
      %s23 = ssub.s32 %s17, 2
      %s24 = sadd.s32 %s17, 1
      %s25 = ssub.s32 %s17, %s24
      %p26 = scmp.eq.s32.totalorder %s25, 0
      %s28 = sadd.s32 %s27, 1
      %s29 = scalar_select %p26, %s27, %s28
      %p32 = pneg %p26
      %p33 = scmp.eq.s32.totalorder %s17, 1
      %p34 = por %p32, %p33
      %p35 = scmp.ne.s32.totalorder %s27, %s30
      %p36 = scmp.eq.s32.totalorder %s17, 0
      %p37 = por %p35, %p36
      %p38 = scmp.ne.s32.totalorder %s27, %s30
      %p39 = scmp.eq.s32.totalorder %s22, 1
      %p40 = por %p38, %p39
      %p41 = scmp.ne.s32.totalorder %s30, %s31
      %p42 = scmp.eq.s32.totalorder %s22, 0
      %p43 = por %p41, %p42
      %p44 = scmp.ne.s32.totalorder %s30, %s31
      %p45 = scmp.eq.s32.totalorder %s23, 1
      %p46 = por %p44, %p45
      %p48 = scmp.ne.s32.totalorder %s31, %s47
      %p49 = scmp.eq.s32.totalorder %s23, 0
      %p50 = por %p48, %p49
      %s52 = sadd.s32 %s51, 1
      %p55 = scmp.eq.s32.totalorder %s17, 1
      %p56 = scmp.ne.s32.totalorder %s51, %s53
      %p57 = scmp.eq.s32.totalorder %s17, 0
      %p58 = por %p56, %p57
      %p59 = scmp.ne.s32.totalorder %s51, %s53
      %p60 = scmp.eq.s32.totalorder %s22, 1
      %p61 = por %p59, %p60
      %p62 = scmp.ne.s32.totalorder %s53, %s54
      %p63 = scmp.eq.s32.totalorder %s22, 0
      %p64 = por %p62, %p63
      %p65 = scmp.ne.s32.totalorder %s53, %s54
      %p66 = scmp.eq.s32.totalorder %s23, 1
      %p67 = por %p65, %p66
      %p69 = scmp.ne.s32.totalorder %s54, %s68
      %p70 = scmp.eq.s32.totalorder %s23, 0
      %p71 = por %p69, %p70
      %s73 = sadd.s32 %s72, 1
      %p76 = scmp.eq.s32.totalorder %s17, 1
      %p77 = scmp.ne.s32.totalorder %s72, %s74
      %p78 = scmp.eq.s32.totalorder %s17, 0
      %p79 = por %p77, %p78
      %p80 = scmp.ne.s32.totalorder %s72, %s74
      %p81 = scmp.eq.s32.totalorder %s22, 1
      %p82 = por %p80, %p81
      %p83 = scmp.ne.s32.totalorder %s74, %s75
      %p84 = scmp.eq.s32.totalorder %s22, 0
      %p85 = por %p83, %p84
      %p86 = scmp.ne.s32.totalorder %s74, %s75
      %p87 = scmp.eq.s32.totalorder %s23, 1
      %p88 = por %p86, %p87
      %p90 = scmp.ne.s32.totalorder %s75, %s89
      %p91 = scmp.eq.s32.totalorder %s23, 0
      %p92 = por %p90, %p91
      %s94 = sadd.s32 %s93, 1
      %p97 = scmp.eq.s32.totalorder %s17, 1
      %p98 = scmp.ne.s32.totalorder %s93, %s95
      %p99 = scmp.eq.s32.totalorder %s17, 0
      %p100 = por %p98, %p99
      %p101 = scmp.ne.s32.totalorder %s93, %s95
      %p102 = scmp.eq.s32.totalorder %s22, 1
      %p103 = por %p101, %p102
      %p104 = scmp.ne.s32.totalorder %s95, %s96
      %p105 = scmp.eq.s32.totalorder %s22, 0
      %p106 = por %p104, %p105
      %p107 = scmp.ne.s32.totalorder %s95, %s96
      %p108 = scmp.eq.s32.totalorder %s23, 1
      %p109 = por %p107, %p108
      %p111 = scmp.ne.s32.totalorder %s96, %s110
      %p112 = scmp.eq.s32.totalorder %s23, 0
      %p113 = por %p111, %p112
      %s115 = sadd.s32 %s114, 1
      %p118 = scmp.eq.s32.totalorder %s17, 1
      %p119 = scmp.ne.s32.totalorder %s114, %s116
      %p120 = scmp.eq.s32.totalorder %s17, 0
      %p121 = por %p119, %p120
      %p122 = scmp.ne.s32.totalorder %s114, %s116
      %p123 = scmp.eq.s32.totalorder %s22, 1
      %p124 = por %p122, %p123
      %p125 = scmp.ne.s32.totalorder %s116, %s117
      %p126 = scmp.eq.s32.totalorder %s22, 0
      %p127 = por %p125, %p126
      %p128 = scmp.ne.s32.totalorder %s116, %s117
      %p129 = scmp.eq.s32.totalorder %s23, 1
      %p130 = por %p128, %p129
      %p132 = scmp.ne.s32.totalorder %s117, %s131
      %p133 = scmp.eq.s32.totalorder %s23, 0
      %p134 = por %p132, %p133
      %s136 = sadd.s32 %s135, 1
      %p139 = scmp.eq.s32.totalorder %s17, 1
      %p140 = scmp.ne.s32.totalorder %s135, %s137
      %p141 = scmp.eq.s32.totalorder %s17, 0
      %p142 = por %p140, %p141
      %p143 = scmp.ne.s32.totalorder %s135, %s137
      %p144 = scmp.eq.s32.totalorder %s22, 1
      %p145 = por %p143, %p144
      %p146 = scmp.ne.s32.totalorder %s137, %s138
      %p147 = scmp.eq.s32.totalorder %s22, 0
      %p148 = por %p146, %p147
      %p149 = scmp.ne.s32.totalorder %s137, %s138
      %p150 = scmp.eq.s32.totalorder %s23, 1
      %p151 = por %p149, %p150
      %p153 = scmp.ne.s32.totalorder %s138, %s152
      %p154 = scmp.eq.s32.totalorder %s23, 0
      %p155 = por %p153, %p154
      %s156 = ssub.s32 %s17, %s24
      %p157 = scmp.eq.s32.totalorder %s156, 0
      %s159 = sadd.s32 %s158, 1
      %s160 = scalar_select %p157, %s158, %s159
      %p163 = pneg %p157
      %p164 = scmp.eq.s32.totalorder %s17, 1
      %p165 = por %p163, %p164
      %p166 = scmp.ne.s32.totalorder %s158, %s161
      %p167 = scmp.eq.s32.totalorder %s17, 0
      %p168 = por %p166, %p167
      %p169 = scmp.ne.s32.totalorder %s158, %s161
      %p170 = scmp.eq.s32.totalorder %s22, 1
      %p171 = por %p169, %p170
      %p172 = scmp.ne.s32.totalorder %s161, %s162
      %p173 = scmp.eq.s32.totalorder %s22, 0
      %p174 = por %p172, %p173
      %p175 = scmp.ne.s32.totalorder %s161, %s162
      %p176 = scmp.eq.s32.totalorder %s23, 1
      %p177 = por %p175, %p176
      %p179 = scmp.ne.s32.totalorder %s162, %s178
      %p180 = scmp.eq.s32.totalorder %s23, 0
      %p181 = por %p179, %p180
      %p182 = scmp.le.s32.totalorder 1, %s17
      %p183 = scmp.lt.s32.totalorder %s17, 3
      %p184 = pnand %p182, %p183
      %p185 = pneg %p184
      // Predicated region
      $region9: #{complex_neural_network.1} parent=5 // pred_check
        _
      $region10: #{complex_neural_network.1} parent=5 // pred_check_branch
        %187 = sbr.rel (%p184) target = $region12
      $region11: #{complex_neural_network.1} parent=5 // pred_region
        %s188 = ssub.s32 %s17, 1
        // Predicated region
        $region13: #{complex_neural_network.1} parent=11 // pred_check
          %p189 = pneg %p64
        $region14: #{complex_neural_network.1} parent=11 // pred_check_branch
          %191 = sbr.rel (%p189) target = $region16
        $region15: #{complex_neural_network.1} parent=11 // pred_region
          _
        $region16: #{complex_neural_network.1} parent=11 // pred_fallthru
          _
        // Predicated region
        $region17: #{complex_neural_network.1} parent=11 // pred_check
          %p192 = pneg %p85
        $region18: #{complex_neural_network.1} parent=11 // pred_check_branch
          %194 = sbr.rel (%p192) target = $region20
        $region19: #{complex_neural_network.1} parent=11 // pred_region
          _
        $region20: #{complex_neural_network.1} parent=11 // pred_fallthru
          _
        // Predicated region
        $region21: #{complex_neural_network.1} parent=11 // pred_check
          %p195 = pneg %p106
        $region22: #{complex_neural_network.1} parent=11 // pred_check_branch
          %197 = sbr.rel (%p195) target = $region24
        $region23: #{complex_neural_network.1} parent=11 // pred_region
          _
        $region24: #{complex_neural_network.1} parent=11 // pred_fallthru
          _
        // Predicated region
        $region25: #{complex_neural_network.1} parent=11 // pred_check
          %p198 = pneg %p127
        $region26: #{complex_neural_network.1} parent=11 // pred_check_branch
          %200 = sbr.rel (%p198) target = $region28
        $region27: #{complex_neural_network.1} parent=11 // pred_region
          _
        $region28: #{complex_neural_network.1} parent=11 // pred_fallthru
          _
        // Predicated region
        $region29: #{complex_neural_network.1} parent=11 // pred_check
          %p201 = pneg %p148
        $region30: #{complex_neural_network.1} parent=11 // pred_check_branch
          %203 = sbr.rel (%p201) target = $region32
        $region31: #{complex_neural_network.1} parent=11 // pred_region
          _
        $region32: #{complex_neural_network.1} parent=11 // pred_fallthru
          _
      $region12: #{complex_neural_network.1} parent=5 // pred_fallthru
        _
      %p204 = scmp.lt.s32.totalorder %s17, 2
      // Predicated region
      $region33: #{complex_neural_network.1} parent=5 // pred_check
        %p205 = pneg %p204
      $region34: #{complex_neural_network.1} parent=5 // pred_check_branch
        %207 = sbr.rel (%p205) target = $region36
      $region35: #{complex_neural_network.1} parent=5 // pred_region
        // Predicated region
        $region37: #{complex_neural_network.1} parent=35 // pred_check
          %p208 = pneg %p37
        $region38: #{complex_neural_network.1} parent=35 // pred_check_branch
          %210 = sbr.rel (%p208) target = $region40
        $region39: #{complex_neural_network.1} parent=35 // pred_region
          %s211 = smul.u32 2, %s17
          %p212 = scmp.lt.s32.totalorder %s211, 3
          %s213 = scalar_select %p212, %s211, 3
          %s214 = smul.addr %s213, 2
          %s215 = scalar_lea.vmem %s0, %s214
          %s216 = smul.u32 2, %s17
        $region40: #{complex_neural_network.1} parent=35 // pred_fallthru
          _
      $region36: #{complex_neural_network.1} parent=5 // pred_fallthru
        _
      %p217 = scmp.le.s32.totalorder 1, %s17
      %p218 = scmp.lt.s32.totalorder %s17, 3
      %p219 = pnand %p217, %p218
      %p220 = pneg %p219
      // Predicated region
      $region41: #{complex_neural_network.1} parent=5 // pred_check
        _
      $region42: #{complex_neural_network.1} parent=5 // pred_check_branch
        %222 = sbr.rel (%p219) target = $region44
      $region43: #{complex_neural_network.1} parent=5 // pred_region
        %s223 = ssub.s32 %s17, 1
        %s224 = smul.u32 2, %s22
        %p225 = scmp.lt.s32.totalorder %s224, 3
        %s226 = scalar_select %p225, %s224, 3
        %s227 = smul.addr %s226, 2
        %s228 = scalar_lea.vmem %s0, %s227
        %p229 = pneg %p43
        %p230 = pneg %p40
        %p231 = pneg %p64
        %p232 = pneg %p61
        %p233 = pneg %p85
        %p234 = pneg %p82
        %p235 = pneg %p106
        %p236 = pneg %p103
        %p237 = pneg %p127
        %p238 = pneg %p124
        %p239 = pneg %p148
        %p240 = pneg %p145
        %p241 = pneg %p174
        %p242 = pneg %p171
        %s243 = sand.u32 %s161, 1
        %s244 = scalar_lea.sflag [#allocation4], %s243
        %s245 = sand.u32 %s161, 1
        %s246 = smul.addr %s245, 2
        %s247 = scalar_lea.vmem [#allocation3], %s246
        %s248 = smul.u32 2, %s22
        %p249 = scmp.lt.s32.totalorder %s248, 3
        %s250 = scalar_select %p249, %s248, 3
        %s251 = smul.addr %s250, 2
        %s252 = scalar_lea.vmem %s0, %s251
        %s253 = smul.u32 2, %s22
        %s254 = smul.u32 2, %s22
        %v255 = vld [vmem:[%s252] ss:$2 sm:$0x3]
        %s256 = scalar_lea.vmem %s252, 1
        %v257 = vld [vmem:[%s256] ss:$2 sm:$0x3]
        %v258 = vld [vmem:[%s1] sm:$0xff]
        %v259 = vld [vmem:[%s1 + $0x8] sm:$0xff]
        %v260 = vld [vmem:[%s1 + $0x10] sm:$0xff]
        %v261 = vld [vmem:[%s1 + $0x18] sm:$0xff]
        %v262 = vld [vmem:[%s1 + $0x20] sm:$0xff]
        %v263 = vld [vmem:[%s1 + $0x28] sm:$0xff]
        %v264 = vld [vmem:[%s1 + $0x30] sm:$0xff]
        %v265 = vld [vmem:[%s1 + $0x38] sm:$0xff]
        %267 = vset.pattern.permute.xlu0 0
        %268 = vperm.xlu0 %267, %v258
        %v269 = vpop.permute.xlu0 %268
        %272 = vset.pattern.permute.xlu0 0
        %273 = vperm.xlu0 %272, %v259
        %v274 = vpop.permute.xlu0 %273
        %277 = vset.pattern.permute.xlu0 0
        %278 = vperm.xlu0 %277, %v260
        %v279 = vpop.permute.xlu0 %278
        %282 = vset.pattern.permute.xlu0 0
        %283 = vperm.xlu0 %282, %v261
        %v284 = vpop.permute.xlu0 %283
        %287 = vset.pattern.permute.xlu0 0
        %288 = vperm.xlu0 %287, %v262
        %v289 = vpop.permute.xlu0 %288
        %292 = vset.pattern.permute.xlu0 0
        %293 = vperm.xlu0 %292, %v263
        %v294 = vpop.permute.xlu0 %293
        %297 = vset.pattern.permute.xlu0 0
        %298 = vperm.xlu0 %297, %v264
        %v299 = vpop.permute.xlu0 %298
        %302 = vset.pattern.permute.xlu0 0
        %303 = vperm.xlu0 %302, %v265
        %v304 = vpop.permute.xlu0 %303
        %v307 = vlaneseq
        %v308 = vshrl.u32 %v307, 7
        %v309 = vsub.s32 0, %v308
        %v310 = vrot.slane %v255, %v309
        %v311 = vlaneseq
        %v312 = vshrl.u32 %v311, 7
        %v313 = vsub.s32 1, %v312
        %v314 = vrot.slane %v255, %v313
        %v317 = vmul.f32 %v269, %v310
        %v318 = vmul.f32 %v269, %v314
        %v319 = vmul.f32 %v274, %v310
        %v320 = vmul.f32 %v274, %v314
        %v321 = vmul.f32 %v279, %v310
        %v322 = vmul.f32 %v279, %v314
        %v323 = vmul.f32 %v284, %v310
        %v324 = vmul.f32 %v284, %v314
        %v325 = vmul.f32 %v289, %v310
        %v326 = vmul.f32 %v289, %v314
        %v327 = vmul.f32 %v294, %v310
        %v328 = vmul.f32 %v294, %v314
        %v329 = vmul.f32 %v299, %v310
        %v330 = vmul.f32 %v299, %v314
        %v331 = vmul.f32 %v304, %v310
        %v332 = vmul.f32 %v304, %v314
        %v333 = vld [vmem:[%s2] sm:$0xff]
        %v334 = vld [vmem:[%s2 + $0x8] sm:$0xff]
        %v335 = vld [vmem:[%s2 + $0x10] sm:$0xff]
        %v336 = vld [vmem:[%s2 + $0x18] sm:$0xff]
        %v337 = vld [vmem:[%s2 + $0x20] sm:$0xff]
        %v338 = vld [vmem:[%s2 + $0x28] sm:$0xff]
        %v339 = vld [vmem:[%s2 + $0x30] sm:$0xff]
        %v340 = vld [vmem:[%s2 + $0x38] sm:$0xff]
        %342 = vset.pattern.permute.xlu0 0
        %343 = vperm.xlu0 %342, %v333
        %v344 = vpop.permute.xlu0 %343
        %347 = vset.pattern.permute.xlu0 0
        %348 = vperm.xlu0 %347, %v334
        %v349 = vpop.permute.xlu0 %348
        %352 = vset.pattern.permute.xlu0 0
        %353 = vperm.xlu0 %352, %v335
        %v354 = vpop.permute.xlu0 %353
        %357 = vset.pattern.permute.xlu0 0
        %358 = vperm.xlu0 %357, %v336
        %v359 = vpop.permute.xlu0 %358
        %362 = vset.pattern.permute.xlu0 0
        %363 = vperm.xlu0 %362, %v337
        %v364 = vpop.permute.xlu0 %363
        %367 = vset.pattern.permute.xlu0 0
        %368 = vperm.xlu0 %367, %v338
        %v369 = vpop.permute.xlu0 %368
        %372 = vset.pattern.permute.xlu0 0
        %373 = vperm.xlu0 %372, %v339
        %v374 = vpop.permute.xlu0 %373
        %377 = vset.pattern.permute.xlu0 0
        %378 = vperm.xlu0 %377, %v340
        %v379 = vpop.permute.xlu0 %378
        %v382 = vlaneseq
        %v383 = vshrl.u32 %v382, 7
        %v384 = vsub.s32 0, %v383
        %v385 = vrot.slane %v257, %v384
        %v386 = vlaneseq
        %v387 = vshrl.u32 %v386, 7
        %v388 = vsub.s32 1, %v387
        %v389 = vrot.slane %v257, %v388
        %v392 = vmul.f32 %v344, %v385
        %v393 = vmul.f32 %v344, %v389
        %v394 = vmul.f32 %v349, %v385
        %v395 = vmul.f32 %v349, %v389
        %v396 = vmul.f32 %v354, %v385
        %v397 = vmul.f32 %v354, %v389
        %v398 = vmul.f32 %v359, %v385
        %v399 = vmul.f32 %v359, %v389
        %v400 = vmul.f32 %v364, %v385
        %v401 = vmul.f32 %v364, %v389
        %v402 = vmul.f32 %v369, %v385
        %v403 = vmul.f32 %v369, %v389
        %v404 = vmul.f32 %v374, %v385
        %v405 = vmul.f32 %v374, %v389
        %v406 = vmul.f32 %v379, %v385
        %v407 = vmul.f32 %v379, %v389
        %v408 = vadd.f32 %v317, %v392
        %v409 = vadd.f32 %v318, %v393
        %v410 = vadd.f32 %v319, %v394
        %v411 = vadd.f32 %v320, %v395
        %v412 = vadd.f32 %v321, %v396
        %v413 = vadd.f32 %v322, %v397
        %v414 = vadd.f32 %v323, %v398
        %v415 = vadd.f32 %v324, %v399
        %v416 = vadd.f32 %v325, %v400
        %v417 = vadd.f32 %v326, %v401
        %v418 = vadd.f32 %v327, %v402
        %v419 = vadd.f32 %v328, %v403
        %v420 = vadd.f32 %v329, %v404
        %v421 = vadd.f32 %v330, %v405
        %v422 = vadd.f32 %v331, %v406
        %v423 = vadd.f32 %v332, %v407
        %v424 = vld [vmem:[%s3] sm:$0xff]
        %v425 = vld [vmem:[%s3 + $0x8] sm:$0xff]
        %v426 = vld [vmem:[%s3 + $0x10] sm:$0xff]
        %v427 = vld [vmem:[%s3 + $0x18] sm:$0xff]
        %v428 = vld [vmem:[%s3 + $0x20] sm:$0xff]
        %v429 = vld [vmem:[%s3 + $0x28] sm:$0xff]
        %v430 = vld [vmem:[%s3 + $0x30] sm:$0xff]
        %v431 = vld [vmem:[%s3 + $0x38] sm:$0xff]
        %433 = vset.pattern.permute.xlu0 0
        %434 = vperm.xlu0 %433, %v424
        %v435 = vpop.permute.xlu0 %434
        %438 = vset.pattern.permute.xlu0 0
        %439 = vperm.xlu0 %438, %v425
        %v440 = vpop.permute.xlu0 %439
        %443 = vset.pattern.permute.xlu0 0
        %444 = vperm.xlu0 %443, %v426
        %v445 = vpop.permute.xlu0 %444
        %448 = vset.pattern.permute.xlu0 0
        %449 = vperm.xlu0 %448, %v427
        %v450 = vpop.permute.xlu0 %449
        %453 = vset.pattern.permute.xlu0 0
        %454 = vperm.xlu0 %453, %v428
        %v455 = vpop.permute.xlu0 %454
        %458 = vset.pattern.permute.xlu0 0
        %459 = vperm.xlu0 %458, %v429
        %v460 = vpop.permute.xlu0 %459
        %463 = vset.pattern.permute.xlu0 0
        %464 = vperm.xlu0 %463, %v430
        %v465 = vpop.permute.xlu0 %464
        %468 = vset.pattern.permute.xlu0 0
        %469 = vperm.xlu0 %468, %v431
        %v470 = vpop.permute.xlu0 %469
        %v472 = vadd.f32 %v408, %v435
        %v473 = vadd.f32 %v409, %v435
        %v474 = vadd.f32 %v410, %v440
        %v475 = vadd.f32 %v411, %v440
        %v476 = vadd.f32 %v412, %v445
        %v477 = vadd.f32 %v413, %v445
        %v478 = vadd.f32 %v414, %v450
        %v479 = vadd.f32 %v415, %v450
        %v480 = vadd.f32 %v416, %v455
        %v481 = vadd.f32 %v417, %v455
        %v482 = vadd.f32 %v418, %v460
        %v483 = vadd.f32 %v419, %v460
        %v484 = vadd.f32 %v420, %v465
        %v485 = vadd.f32 %v421, %v465
        %v486 = vadd.f32 %v422, %v470
        %v487 = vadd.f32 %v423, %v470
        %v488 = vmax.f32 %v472, 0.0
        %v489 = vmax.f32 %v473, 0.0
        %v490 = vmax.f32 %v474, 0.0
        %v491 = vmax.f32 %v475, 0.0
        %v492 = vmax.f32 %v476, 0.0
        %v493 = vmax.f32 %v477, 0.0
        %v494 = vmax.f32 %v478, 0.0
        %v495 = vmax.f32 %v479, 0.0
        %v496 = vmax.f32 %v480, 0.0
        %v497 = vmax.f32 %v481, 0.0
        %v498 = vmax.f32 %v482, 0.0
        %v499 = vmax.f32 %v483, 0.0
        %v500 = vmax.f32 %v484, 0.0
        %v501 = vmax.f32 %v485, 0.0
        %v502 = vmax.f32 %v486, 0.0
        %v503 = vmax.f32 %v487, 0.0
        %v504 = vld [vmem:[%s4] sm:$0xff]
        %v505 = vld [vmem:[%s4 + $0x8] sm:$0xff]
        %v506 = vld [vmem:[%s4 + $0x10] sm:$0xff]
        %v507 = vld [vmem:[%s4 + $0x18] sm:$0xff]
        %v508 = vld [vmem:[%s4 + $0x20] sm:$0xff]
        %v509 = vld [vmem:[%s4 + $0x28] sm:$0xff]
        %v510 = vld [vmem:[%s4 + $0x30] sm:$0xff]
        %v511 = vld [vmem:[%s4 + $0x38] sm:$0xff]
        %513 = vset.pattern.permute.xlu0 0
        %514 = vperm.xlu0 %513, %v504
        %v515 = vpop.permute.xlu0 %514
        %518 = vset.pattern.permute.xlu0 0
        %519 = vperm.xlu0 %518, %v505
        %v520 = vpop.permute.xlu0 %519
        %523 = vset.pattern.permute.xlu0 0
        %524 = vperm.xlu0 %523, %v506
        %v525 = vpop.permute.xlu0 %524
        %528 = vset.pattern.permute.xlu0 0
        %529 = vperm.xlu0 %528, %v507
        %v530 = vpop.permute.xlu0 %529
        %533 = vset.pattern.permute.xlu0 0
        %534 = vperm.xlu0 %533, %v508
        %v535 = vpop.permute.xlu0 %534
        %538 = vset.pattern.permute.xlu0 0
        %539 = vperm.xlu0 %538, %v509
        %v540 = vpop.permute.xlu0 %539
        %543 = vset.pattern.permute.xlu0 0
        %544 = vperm.xlu0 %543, %v510
        %v545 = vpop.permute.xlu0 %544
        %548 = vset.pattern.permute.xlu0 0
        %549 = vperm.xlu0 %548, %v511
        %v550 = vpop.permute.xlu0 %549
        %v552 = vmul.f32 %v488, %v515
        %v553 = vmul.f32 %v489, %v515
        %v554 = vmul.f32 %v490, %v520
        %v555 = vmul.f32 %v491, %v520
        %v556 = vmul.f32 %v492, %v525
        %v557 = vmul.f32 %v493, %v525
        %v558 = vmul.f32 %v494, %v530
        %v559 = vmul.f32 %v495, %v530
        %v560 = vmul.f32 %v496, %v535
        %v561 = vmul.f32 %v497, %v535
        %v562 = vmul.f32 %v498, %v540
        %v563 = vmul.f32 %v499, %v540
        %v564 = vmul.f32 %v500, %v545
        %v565 = vmul.f32 %v501, %v545
        %v566 = vmul.f32 %v502, %v550
        %v567 = vmul.f32 %v503, %v550
        %v568 = vadd.f32 %v552, %v554
        %v569 = vadd.f32 %v568, %v556
        %v570 = vadd.f32 %v569, %v558
        %v571 = vadd.f32 %v570, %v560
        %v572 = vadd.f32 %v571, %v562
        %v573 = vadd.f32 %v572, %v564
        %v574 = vadd.f32 %v573, %v566
        %v575 = vrot.slane %v574, 4
        %v576 = vadd.f32 %v574, %v575
        %v577 = vrot.slane %v576, 2
        %v578 = vadd.f32 %v576, %v577
        %v579 = vrot.slane %v578, 1
        %v580 = vadd.f32 %v578, %v579
        %v581 = vadd.f32 %v553, %v555
        %v582 = vadd.f32 %v581, %v557
        %v583 = vadd.f32 %v582, %v559
        %v584 = vadd.f32 %v583, %v561
        %v585 = vadd.f32 %v584, %v563
        %v586 = vadd.f32 %v585, %v565
        %v587 = vadd.f32 %v586, %v567
        %v588 = vrot.slane %v587, 4
        %v589 = vadd.f32 %v587, %v588
        %v590 = vrot.slane %v589, 2
        %v591 = vadd.f32 %v589, %v590
        %v592 = vrot.slane %v591, 1
        %v593 = vadd.f32 %v591, %v592
        %v594 = vld [vmem:[#allocation2] sm:$0x1]
        %596 = vset.pattern.permute.xlu0 0
        %597 = vperm.xlu0 %596, %v594
        %v598 = vpop.permute.xlu0 %597
        %v600 = vlaneseq
        %v601 = vshrl.u32 %v600, 7
        %v602 = vsub.s32 0, %v601
        %v603 = vrot.slane %v598, %v602
        %v604 = vadd.f32 %v580, %v603
        %v605 = vadd.f32 %v593, %v603
        %v606 = vxor.u32 %v604, 2147483648
        %v607 = vxor.u32 %v605, 2147483648
        %v608 = vmul.f32 %v606, 1.442695
        %v609 = vpow.pop %v608
        %v610 = vmul.f32 %v607, 1.442695
        %v611 = vpow.pop %v610
        %v612 = vadd.f32 %v609, 1.0
        %v613 = vadd.f32 %v611, 1.0
        %v614 = vrcp.pop %v612
        %v615 = vmul.f32 1.0, %v614
        %v616 = vrcp.pop %v613
        %v617 = vmul.f32 1.0, %v616
        %v620 = vcombine.low %v615, %v617
        %v622 = vunpack.c.l.s4 1966171168
        %v623 = vunpack.c.0.s8 %v622
        %v624 = vlaneseq
        %v625 = vshrl.u32 %v624, 7
        %v626 = vsub.s32 %v623, %v625
        %v627 = vrot.slane %v620, %v626
        %v629 = vunpack.c.l.s4 1966171168
        %v630 = vunpack.c.0.s8 %v629
        %v631 = vlaneseq
        %v632 = vshrl.u32 %v631, 7
        %v633 = vsub.s32 %v630, %v632
        %v634 = vrot.slane %v627, %v633
        %v636 = vlaneseq
        %vm637 = vcmp.ge.s32.totalorder %v636, 0
        %vm638 = vcmp.lt.s32.totalorder %v636, 256
        %vm639 = vmand %vm637, %vm638
        %640 = vst.msk [vmem:[%s247] sm:$0x3] %vm639, %v634
        %s641 = sand.u32 %s161, 1
        %s642 = scalar_lea.sflag [#allocation4], %s641
        %s643 = sand.u32 %s161, 1
        %s644 = smul.addr %s643, 2
        %s645 = scalar_lea.vmem [#allocation3], %s644
        // Predicated region
        $region45: #{complex_neural_network.1} parent=43 // pred_check
          %p646 = pneg %p171
        $region46: #{complex_neural_network.1} parent=43 // pred_check_branch
          %648 = sbr.rel (%p646) target = $region48
        $region47: #{complex_neural_network.1} parent=43 // pred_region
          %s649 = smul.u32 2, %s22
          %s651 = ssub.s32 32, 32
          %652 = vsyncadd %s642, %s651
          %s653 = smul.addr %s649, 16
          %s654 = scalar_lea.hbm %s6, %s653
          %s656 = sshll.u32 %s645, 4
          %s657 = int_to_ptr.vmem [resolvable:$true] %s656
          %659 = dma.vmem_to_hbm [thread:$0]  %s657, 32, %s654, %s642
        $region48: #{complex_neural_network.1} parent=43 // pred_fallthru
          _
      $region44: #{complex_neural_network.1} parent=5 // pred_fallthru
        _
      %p660 = scmp.le.s32.totalorder 2, %s17
      // Predicated region
      $region49: #{complex_neural_network.1} parent=5 // pred_check
        %p661 = pneg %p660
      $region50: #{complex_neural_network.1} parent=5 // pred_check_branch
        %663 = sbr.rel (%p661) target = $region52
      $region51: #{complex_neural_network.1} parent=5 // pred_region
        %s664 = ssub.s32 %s17, 2
        // Predicated region
        $region53: #{complex_neural_network.1} parent=51 // pred_check
          %p665 = pneg %p177
        $region54: #{complex_neural_network.1} parent=51 // pred_check_branch
          %667 = sbr.rel (%p665) target = $region56
        $region55: #{complex_neural_network.1} parent=51 // pred_region
          %s668 = sand.u32 %s162, 1
          %s669 = scalar_lea.sflag [#allocation4], %s668
          %s670 = sand.u32 %s162, 1
          %s671 = smul.addr %s670, 2
          %s672 = scalar_lea.vmem [#allocation3], %s671
          %673 = dma.done %s669, 32
        $region56: #{complex_neural_network.1} parent=51 // pred_fallthru
          _
      $region52: #{complex_neural_network.1} parent=5 // pred_fallthru
        _
    $region6: #{complex_neural_network.1} parent=1 // loop_footer
      %s21 = sadd.s32 1, %s17
    $region7: #{complex_neural_network.1} parent=1 // loop_footer_branch
      %16 = sbr.rel target = $region3
    $region8: #{complex_neural_network.1} parent=1 // loop_exit
      _
    %674 = vsyncpa [#allocation4], 1
    %s675 = scalar_lea.sflag [#allocation4], 1
    %676 = vsyncpa %s675, 1

</llo_original>
